<compile_context>
chip_gen: v7x
topology: tpu7x:2x2x1
jax: 0.10.0
libtpu: 0.0.40
codegen_flags: <defaults>
</compile_context>

<pallas_src>
import functools

import jax
import jax.numpy as jnp
from jax.experimental import pallas as pl
from jax.experimental.pallas import tpu as pltpu


def _round_up(x, m):
    return ((x + m - 1) // m) * m


# ---------------------------------------------------------------------------
# Kernel bodies: betas_muscle[b, m*D + d] = AW[m, d] * tb[b, d]
# ---------------------------------------------------------------------------
def _make_dense_kernel(M, D):
    """Build the full lane-dense [tB, M*D] slab in registers, one dense store."""
    def kernel(tb_ref, aw_ref, bm_ref):
        tb = tb_ref[...]                                   # [tB, D]
        tiled = jnp.concatenate([tb] * M, axis=1)          # [tB, M*D], lane-dense
        bm_ref[...] = tiled * aw_ref[...]                  # aw_ref: [1, M*D]
    return kernel


def _make_sliced_kernel(M, D):
    """Fallback: per-muscle lane-slice writes into the dense [tB, M*D] block."""
    def kernel(tb_ref, aw_ref, bm_ref):
        tb = tb_ref[...]                                   # [tB, D]
        for m in range(M):                                 # static unroll
            awm = aw_ref[:, m * D:(m + 1) * D]             # [1, D]
            bm_ref[:, m * D:(m + 1) * D] = tb * awm
    return kernel


# ---------------------------------------------------------------------------
# Probe: does this Mosaic build lower unaligned lane-dim concatenation
# correctly?  Result is cached; run it once outside of tracing if possible.
# ---------------------------------------------------------------------------
@functools.lru_cache(maxsize=None)
def _unaligned_lane_concat_ok(M, D):
    def probe(x_ref, o_ref):
        o_ref[...] = jnp.concatenate([x_ref[...]] * M, axis=1)

    try:
        with jax.ensure_compile_time_eval():
            x = (jnp.arange(8 * D, dtype=jnp.float32).reshape(8, D) + 1.0)
            out = pl.pallas_call(
                probe,
                out_shape=jax.ShapeDtypeStruct((8, M * D), jnp.float32),
            )(x)
            jax.block_until_ready(out)
            expected = jnp.tile(x, (1, M))
            return bool(jnp.allclose(out, expected))
    except Exception:
        return False


# ---------------------------------------------------------------------------
# Wrapper
# ---------------------------------------------------------------------------
def _axis_angle_to_quaternion(aa):
    """pytorch3d.axis_angle_to_quaternion ([w, x, y, z] per part)."""
    angles = jnp.sqrt(jnp.sum(aa * aa, axis=-1, keepdims=True))
    half = 0.5 * angles
    small = jnp.abs(angles) < 1e-6
    sinc = jnp.where(small, 0.5 - angles * angles * (1.0 / 48.0),
                     jnp.sin(half) / jnp.where(small, 1.0, angles))
    return jnp.concatenate([jnp.cos(half), aa * sinc], axis=-1)


def _choose_batch_tile(B, MD, D, tile_b):
    if B <= 8:
        return B
    # >= 2 grid steps so the "parallel" batch axis can use both v7x TensorCores.
    tB = min(max(8, (tile_b // 8) * 8), max(8, _round_up(pl.cdiv(B, 2), 8)))
    # Keep double-buffered (in + out) blocks under ~12 MiB of VMEM.
    per_row_bytes = 2 * 4 * (_round_up(MD, 128) + _round_up(D, 128))
    max_rows = max(8, (12 * 1024 * 1024 // per_row_bytes) // 8 * 8)
    return min(tB, max_rows)


def betas_muscle_predictor(pose, betas, A_param, W, num_parts, num_muscle,
                           shape_betas_for_muscles, tile_b=1024, impl="auto"):
    """JAX/Pallas port of BetasMusclePredictor.forward -> (betas_muscle, AW)."""
    B = pose.shape[0]
    P = num_parts
    Q = 4 * P
    M = num_muscle
    S = shape_betas_for_muscles
    D = Q + S
    MD = M * D
    assert A_param.shape == (M, D) and W.shape == (M, D)

    pose = pose.astype(jnp.float32)

    # --- tiny wrapper prep (XLA): quaternion (+ betas concat) and AW = A*W ---
    aa = pose[:, 3:3 + 3 * P].reshape(B, P, 3)
    quat = _axis_angle_to_quaternion(aa).reshape(B, Q)
    if S > 0:
        tb = jnp.concatenate([quat, betas[:, :S].astype(jnp.float32)], axis=1)
    else:
        tb = quat                                               # [B, D]
    aw = A_param.astype(jnp.float32) * W.astype(jnp.float32)    # [M, D]
    aw_flat = aw.reshape(1, MD)                                 # resident param

    # --- kernel variant selection (probe is cached; safe fallback on failure) ---
    if impl == "auto":
        use_dense = _unaligned_lane_concat_ok(M, D)
    else:
        use_dense = (impl == "dense")
    kernel = _make_dense_kernel(M, D) if use_dense else _make_sliced_kernel(M, D)

    # --- batch tiling / grid ---
    tB = _choose_batch_tile(B, MD, D, tile_b)
    grid = (pl.cdiv(B, tB),)

    cost = pl.CostEstimate(
        flops=int(B * MD),
        transcendentals=0,
        bytes_accessed=int(4 * (B * D + MD + B * MD)),
    )

    bm_flat = pl.pallas_call(
        kernel,
        out_shape=jax.ShapeDtypeStruct((B, MD), jnp.float32),
        grid=grid,
        in_specs=[
            pl.BlockSpec((tB, D), lambda i: (i, 0)),      # tb, streamed over batch
            pl.BlockSpec((1, MD), lambda i: (0, 0)),      # AW, resident in VMEM
        ],
        out_specs=pl.BlockSpec((tB, MD), lambda i: (i, 0)),
        compiler_params=pltpu.CompilerParams(
            dimension_semantics=("parallel",),
            vmem_limit_bytes=int(32 * 1024 * 1024),
        ),
        cost_estimate=cost,
    )(tb, aw_flat)

    # Free reshape: [B, M*D] is row-major identical to [B, M, D].
    betas_muscle = bm_flat.reshape(B, M, D)
    return betas_muscle, aw


# ---------------------------------------------------------------------------
# Pure-JAX reference (mirrors the PyTorch forward exactly), for validation.
# ---------------------------------------------------------------------------
def reference(pose, betas, A_param, W, num_parts, shape_betas_for_muscles):
    B = pose.shape[0]
    aa = pose[:, 3:].reshape(B, num_parts, 3)
    angles = jnp.sqrt(jnp.sum(aa * aa, axis=-1, keepdims=True))
    half = 0.5 * angles
    small = jnp.abs(angles) < 1e-6
    sinc = jnp.where(small, 0.5 - angles * angles / 48.0,
                     jnp.sin(half) / jnp.where(small, 1.0, angles))
    quat = jnp.concatenate([jnp.cos(half), aa * sinc], axis=-1).reshape(B, num_parts * 4)
    if shape_betas_for_muscles > 0:
        tb = jnp.concatenate([quat, betas[:, :shape_betas_for_muscles]], axis=1)
    else:
        tb = quat
    aw = A_param * W
    return aw[None, :, :] * tb[:, None, :], aw


if __name__ == "__main__":
    # Small but shape-consistent config.
    B = 2
    num_parts = 8                 # -> num_pose = 32
    num_muscle = 16
    shape_betas_for_muscles = 4
    num_betas = 10
    num_pose = num_parts * 4
    D = num_pose + shape_betas_for_muscles

    key = jax.random.PRNGKey(0)
    k_pose, k_betas, k_A, k_W = jax.random.split(key, 4)

    pose = jax.random.normal(k_pose, (B, 3 + 3 * num_parts), dtype=jnp.float32)
    betas = jax.random.normal(k_betas, (B, num_betas), dtype=jnp.float32)

    # Deterministic parameter construction matching __init__ semantics:
    #   A (input) has shape [num_parts, num_muscle]; A_here[:, 4p+k] = A[p, :],
    #   trailing shape-betas columns set to 1.
    A_in = jax.random.normal(k_A, (num_parts, num_muscle), dtype=jnp.float32) * 0.1
    A_here = jnp.zeros((num_muscle, D), dtype=jnp.float32)
    for p in range(num_parts):
        for k in range(4):
            A_here = A_here.at[:, 4 * p + k].set(A_in[p, :])
    A_here = A_here.at[:, num_pose:].set(1.0)

    # muscledef.weight ~ N(0, 0.001), shape [num_muscle, D] (Linear, bias=False).
    W = jax.random.normal(k_W, (num_muscle, D), dtype=jnp.float32) * 0.001

    # Decide the in-kernel slab-build strategy once, outside of tracing.
    _unaligned_lane_concat_ok(num_muscle, D)

    run = jax.jit(functools.partial(
        betas_muscle_predictor,
        num_parts=num_parts, num_muscle=num_muscle,
        shape_betas_for_muscles=shape_betas_for_muscles))

    betas_muscle, AW = run(pose, betas, A_here, W)
    jax.block_until_ready((betas_muscle, AW))

    bm_ref, aw_ref_val = reference(pose, betas, A_here, W, num_parts,
                                   shape_betas_for_muscles)
    assert betas_muscle.shape == (B, num_muscle, D)
    assert AW.shape == (num_muscle, D)
    assert jnp.allclose(betas_muscle, bm_ref, atol=1e-6, rtol=1e-5)
    assert jnp.allclose(AW, aw_ref_val, atol=1e-6, rtol=1e-5)

    # Second check: multi-block grid (>=2 steps) with a partial tail block.
    B2 = 50
    pose2 = jax.random.normal(jax.random.PRNGKey(1), (B2, 3 + 3 * num_parts),
                              dtype=jnp.float32)
    betas2 = jax.random.normal(jax.random.PRNGKey(2), (B2, num_betas),
                               dtype=jnp.float32)
    bm2, aw2 = run(pose2, betas2, A_here, W)
    jax.block_until_ready((bm2, aw2))
    bm2_ref, _ = reference(pose2, betas2, A_here, W, num_parts,
                           shape_betas_for_muscles)
    assert jnp.allclose(bm2, bm2_ref, atol=1e-6, rtol=1e-5)

    print("KERNEL_OK")
</pallas_src>

<mosaic_0001>
module attributes {stable_mosaic.version = 11 : i64} {
  func.func @probe(%arg0: memref<8x36xf32, #tpu.memory_space<vmem>>, %arg1: memref<8x576xf32, #tpu.memory_space<vmem>>) attributes {dimension_semantics = [], scalar_prefetch = 0 : i64, scratch_operands = 0 : i64, tpu.core_type = #tpu.core_type<tc>} {
    %c0 = arith.constant 0 : index
    %c0_0 = arith.constant 0 : index
    %0 = vector.load %arg0[%c0, %c0_0] : memref<8x36xf32, #tpu.memory_space<vmem>>, vector<8x36xf32>
    %1 = tpu.concatenate %0, %0, %0, %0, %0, %0, %0, %0, %0, %0, %0, %0, %0, %0, %0, %0 in 1 : vector<8x36xf32>, vector<8x36xf32>, vector<8x36xf32>, vector<8x36xf32>, vector<8x36xf32>, vector<8x36xf32>, vector<8x36xf32>, vector<8x36xf32>, vector<8x36xf32>, vector<8x36xf32>, vector<8x36xf32>, vector<8x36xf32>, vector<8x36xf32>, vector<8x36xf32>, vector<8x36xf32>, vector<8x36xf32> -> vector<8x576xf32>
    %c0_1 = arith.constant 0 : index
    %c0_2 = arith.constant 0 : index
    %2 = vector.load %arg1[%c0_1, %c0_2] : memref<8x576xf32, #tpu.memory_space<vmem>>, vector<8x576xf32>
    tpu.vector_store %arg1[%c0_1, %c0_2], %1 {strides = array<i32>} : memref<8x576xf32, #tpu.memory_space<vmem>>, vector<8x576xf32>,
    return
  }
}

module attributes {stable_mosaic.version = 11 : i64} {
  func.func @kernel(%arg0: i32, %arg1: memref<2x36xf32, #tpu.memory_space<vmem>>, %arg2: memref<1x576xf32, #tpu.memory_space<vmem>>, %arg3: memref<2x576xf32, #tpu.memory_space<vmem>>) attributes {dimension_semantics = [#tpu.dimension_semantics<parallel>], iteration_bounds = array<i64: 1>, scalar_prefetch = 0 : i64, scratch_operands = 0 : i64, tpu.core_type = #tpu.core_type<tc>, window_params = [{transform_indices = @transform_0, window_bounds = array<i64: 2, 36>}, {pipeline_mode = #tpu.pipeline_mode<synchronous>, transform_indices = @transform_1, window_bounds = array<i64: 1, 576>}, {transform_indices = @transform_2, window_bounds = array<i64: 2, 576>}]} {
    %c0 = arith.constant 0 : index
    %c0_0 = arith.constant 0 : index
    %0 = vector.load %arg1[%c0, %c0_0] : memref<2x36xf32, #tpu.memory_space<vmem>>, vector<2x36xf32>
    %c0_1 = arith.constant 0 : index
    %c0_2 = arith.constant 0 : index
    %1 = vector.load %arg2[%c0_1, %c0_2] : memref<1x576xf32, #tpu.memory_space<vmem>>, vector<1x36xf32>
    %2 = vector.broadcast %1 : vector<1x36xf32> to vector<2x36xf32>
    %3 = arith.mulf %0, %2 : vector<2x36xf32>
    %c0_3 = arith.constant 0 : index
    %c0_4 = arith.constant 0 : index
    %4 = vector.load %arg3[%c0_3, %c0_4] : memref<2x576xf32, #tpu.memory_space<vmem>>, vector<2x36xf32>
    tpu.vector_store %arg3[%c0_3, %c0_4], %3 {strides = array<i32>} : memref<2x576xf32, #tpu.memory_space<vmem>>, vector<2x36xf32>,
    %c0_5 = arith.constant 0 : index
    %c36 = arith.constant 36 : index
    %5 = vector.load %arg2[%c0_5, %c36] : memref<1x576xf32, #tpu.memory_space<vmem>>, vector<1x36xf32>
    %6 = vector.broadcast %5 : vector<1x36xf32> to vector<2x36xf32>
    %7 = arith.mulf %0, %6 : vector<2x36xf32>
    %c0_6 = arith.constant 0 : index
    %c36_7 = arith.constant 36 : index
    %8 = vector.load %arg3[%c0_6, %c36_7] : memref<2x576xf32, #tpu.memory_space<vmem>>, vector<2x36xf32>
    tpu.vector_store %arg3[%c0_6, %c36_7], %7 {strides = array<i32>} : memref<2x576xf32, #tpu.memory_space<vmem>>, vector<2x36xf32>,
    %c0_8 = arith.constant 0 : index
    %c72 = arith.constant 72 : index
    %9 = vector.load %arg2[%c0_8, %c72] : memref<1x576xf32, #tpu.memory_space<vmem>>, vector<1x36xf32>
    %10 = vector.broadcast %9 : vector<1x36xf32> to vector<2x36xf32>
    %11 = arith.mulf %0, %10 : vector<2x36xf32>
    %c0_9 = arith.constant 0 : index
    %c72_10 = arith.constant 72 : index
    %12 = vector.load %arg3[%c0_9, %c72_10] : memref<2x576xf32, #tpu.memory_space<vmem>>, vector<2x36xf32>
    tpu.vector_store %arg3[%c0_9, %c72_10], %11 {strides = array<i32>} : memref<2x576xf32, #tpu.memory_space<vmem>>, vector<2x36xf32>,
    %c0_11 = arith.constant 0 : index
    %c108 = arith.constant 108 : index
    %13 = vector.load %arg2[%c0_11, %c108] : memref<1x576xf32, #tpu.memory_space<vmem>>, vector<1x36xf32>
    %14 = vector.broadcast %13 : vector<1x36xf32> to vector<2x36xf32>
    %15 = arith.mulf %0, %14 : vector<2x36xf32>
    %c0_12 = arith.constant 0 : index
    %c108_13 = arith.constant 108 : index
    %16 = vector.load %arg3[%c0_12, %c108_13] : memref<2x576xf32, #tpu.memory_space<vmem>>, vector<2x36xf32>
    tpu.vector_store %arg3[%c0_12, %c108_13], %15 {strides = array<i32>} : memref<2x576xf32, #tpu.memory_space<vmem>>, vector<2x36xf32>,
    %c0_14 = arith.constant 0 : index
    %c144 = arith.constant 144 : index
    %17 = vector.load %arg2[%c0_14, %c144] : memref<1x576xf32, #tpu.memory_space<vmem>>, vector<1x36xf32>
    %18 = vector.broadcast %17 : vector<1x36xf32> to vector<2x36xf32>
    %19 = arith.mulf %0, %18 : vector<2x36xf32>
    %c0_15 = arith.constant 0 : index
    %c144_16 = arith.constant 144 : index
    %20 = vector.load %arg3[%c0_15, %c144_16] : memref<2x576xf32, #tpu.memory_space<vmem>>, vector<2x36xf32>
    tpu.vector_store %arg3[%c0_15, %c144_16], %19 {strides = array<i32>} : memref<2x576xf32, #tpu.memory_space<vmem>>, vector<2x36xf32>,
    %c0_17 = arith.constant 0 : index
    %c180 = arith.constant 180 : index
    %21 = vector.load %arg2[%c0_17, %c180] : memref<1x576xf32, #tpu.memory_space<vmem>>, vector<1x36xf32>
    %22 = vector.broadcast %21 : vector<1x36xf32> to vector<2x36xf32>
    %23 = arith.mulf %0, %22 : vector<2x36xf32>
    %c0_18 = arith.constant 0 : index
    %c180_19 = arith.constant 180 : index
    %24 = vector.load %arg3[%c0_18, %c180_19] : memref<2x576xf32, #tpu.memory_space<vmem>>, vector<2x36xf32>
    tpu.vector_store %arg3[%c0_18, %c180_19], %23 {strides = array<i32>} : memref<2x576xf32, #tpu.memory_space<vmem>>, vector<2x36xf32>,
    %c0_20 = arith.constant 0 : index
    %c216 = arith.constant 216 : index
    %25 = vector.load %arg2[%c0_20, %c216] : memref<1x576xf32, #tpu.memory_space<vmem>>, vector<1x36xf32>
    %26 = vector.broadcast %25 : vector<1x36xf32> to vector<2x36xf32>
    %27 = arith.mulf %0, %26 : vector<2x36xf32>
    %c0_21 = arith.constant 0 : index
    %c216_22 = arith.constant 216 : index
    %28 = vector.load %arg3[%c0_21, %c216_22] : memref<2x576xf32, #tpu.memory_space<vmem>>, vector<2x36xf32>
    tpu.vector_store %arg3[%c0_21, %c216_22], %27 {strides = array<i32>} : memref<2x576xf32, #tpu.memory_space<vmem>>, vector<2x36xf32>,
    %c0_23 = arith.constant 0 : index
    %c252 = arith.constant 252 : index
    %29 = vector.load %arg2[%c0_23, %c252] : memref<1x576xf32, #tpu.memory_space<vmem>>, vector<1x36xf32>
    %30 = vector.broadcast %29 : vector<1x36xf32> to vector<2x36xf32>
    %31 = arith.mulf %0, %30 : vector<2x36xf32>
    %c0_24 = arith.constant 0 : index
    %c252_25 = arith.constant 252 : index
    %32 = vector.load %arg3[%c0_24, %c252_25] : memref<2x576xf32, #tpu.memory_space<vmem>>, vector<2x36xf32>
    tpu.vector_store %arg3[%c0_24, %c252_25], %31 {strides = array<i32>} : memref<2x576xf32, #tpu.memory_space<vmem>>, vector<2x36xf32>,
    %c0_26 = arith.constant 0 : index
    %c288 = arith.constant 288 : index
    %33 = vector.load %arg2[%c0_26, %c288] : memref<1x576xf32, #tpu.memory_space<vmem>>, vector<1x36xf32>
    %34 = vector.broadcast %33 : vector<1x36xf32> to vector<2x36xf32>
    %35 = arith.mulf %0, %34 : vector<2x36xf32>
    %c0_27 = arith.constant 0 : index
    %c288_28 = arith.constant 288 : index
    %36 = vector.load %arg3[%c0_27, %c288_28] : memref<2x576xf32, #tpu.memory_space<vmem>>, vector<2x36xf32>
    tpu.vector_store %arg3[%c0_27, %c288_28], %35 {strides = array<i32>} : memref<2x576xf32, #tpu.memory_space<vmem>>, vector<2x36xf32>,
    %c0_29 = arith.constant 0 : index
    %c324 = arith.constant 324 : index
    %37 = vector.load %arg2[%c0_29, %c324] : memref<1x576xf32, #tpu.memory_space<vmem>>, vector<1x36xf32>
    %38 = vector.broadcast %37 : vector<1x36xf32> to vector<2x36xf32>
    %39 = arith.mulf %0, %38 : vector<2x36xf32>
    %c0_30 = arith.constant 0 : index
    %c324_31 = arith.constant 324 : index
    %40 = vector.load %arg3[%c0_30, %c324_31] : memref<2x576xf32, #tpu.memory_space<vmem>>, vector<2x36xf32>
    tpu.vector_store %arg3[%c0_30, %c324_31], %39 {strides = array<i32>} : memref<2x576xf32, #tpu.memory_space<vmem>>, vector<2x36xf32>,
    %c0_32 = arith.constant 0 : index
    %c360 = arith.constant 360 : index
    %41 = vector.load %arg2[%c0_32, %c360] : memref<1x576xf32, #tpu.memory_space<vmem>>, vector<1x36xf32>
    %42 = vector.broadcast %41 : vector<1x36xf32> to vector<2x36xf32>
    %43 = arith.mulf %0, %42 : vector<2x36xf32>
    %c0_33 = arith.constant 0 : index
    %c360_34 = arith.constant 360 : index
    %44 = vector.load %arg3[%c0_33, %c360_34] : memref<2x576xf32, #tpu.memory_space<vmem>>, vector<2x36xf32>
    tpu.vector_store %arg3[%c0_33, %c360_34], %43 {strides = array<i32>} : memref<2x576xf32, #tpu.memory_space<vmem>>, vector<2x36xf32>,
    %c0_35 = arith.constant 0 : index
    %c396 = arith.constant 396 : index
    %45 = vector.load %arg2[%c0_35, %c396] : memref<1x576xf32, #tpu.memory_space<vmem>>, vector<1x36xf32>
    %46 = vector.broadcast %45 : vector<1x36xf32> to vector<2x36xf32>
    %47 = arith.mulf %0, %46 : vector<2x36xf32>
    %c0_36 = arith.constant 0 : index
    %c396_37 = arith.constant 396 : index
    %48 = vector.load %arg3[%c0_36, %c396_37] : memref<2x576xf32, #tpu.memory_space<vmem>>, vector<2x36xf32>
    tpu.vector_store %arg3[%c0_36, %c396_37], %47 {strides = array<i32>} : memref<2x576xf32, #tpu.memory_space<vmem>>, vector<2x36xf32>,
    %c0_38 = arith.constant 0 : index
    %c432 = arith.constant 432 : index
    %49 = vector.load %arg2[%c0_38, %c432] : memref<1x576xf32, #tpu.memory_space<vmem>>, vector<1x36xf32>
    %50 = vector.broadcast %49 : vector<1x36xf32> to vector<2x36xf32>
    %51 = arith.mulf %0, %50 : vector<2x36xf32>
    %c0_39 = arith.constant 0 : index
    %c432_40 = arith.constant 432 : index
    %52 = vector.load %arg3[%c0_39, %c432_40] : memref<2x576xf32, #tpu.memory_space<vmem>>, vector<2x36xf32>
    tpu.vector_store %arg3[%c0_39, %c432_40], %51 {strides = array<i32>} : memref<2x576xf32, #tpu.memory_space<vmem>>, vector<2x36xf32>,
    %c0_41 = arith.constant 0 : index
    %c468 = arith.constant 468 : index
    %53 = vector.load %arg2[%c0_41, %c468] : memref<1x576xf32, #tpu.memory_space<vmem>>, vector<1x36xf32>
    %54 = vector.broadcast %53 : vector<1x36xf32> to vector<2x36xf32>
    %55 = arith.mulf %0, %54 : vector<2x36xf32>
    %c0_42 = arith.constant 0 : index
    %c468_43 = arith.constant 468 : index
    %56 = vector.load %arg3[%c0_42, %c468_43] : memref<2x576xf32, #tpu.memory_space<vmem>>, vector<2x36xf32>
    tpu.vector_store %arg3[%c0_42, %c468_43], %55 {strides = array<i32>} : memref<2x576xf32, #tpu.memory_space<vmem>>, vector<2x36xf32>,
    %c0_44 = arith.constant 0 : index
    %c504 = arith.constant 504 : index
    %57 = vector.load %arg2[%c0_44, %c504] : memref<1x576xf32, #tpu.memory_space<vmem>>, vector<1x36xf32>
    %58 = vector.broadcast %57 : vector<1x36xf32> to vector<2x36xf32>
    %59 = arith.mulf %0, %58 : vector<2x36xf32>
    %c0_45 = arith.constant 0 : index
    %c504_46 = arith.constant 504 : index
    %60 = vector.load %arg3[%c0_45, %c504_46] : memref<2x576xf32, #tpu.memory_space<vmem>>, vector<2x36xf32>
    tpu.vector_store %arg3[%c0_45, %c504_46], %59 {strides = array<i32>} : memref<2x576xf32, #tpu.memory_space<vmem>>, vector<2x36xf32>,
    %c0_47 = arith.constant 0 : index
    %c540 = arith.constant 540 : index
    %61 = vector.load %arg2[%c0_47, %c540] : memref<1x576xf32, #tpu.memory_space<vmem>>, vector<1x36xf32>
    %62 = vector.broadcast %61 : vector<1x36xf32> to vector<2x36xf32>
    %63 = arith.mulf %0, %62 : vector<2x36xf32>
    %c0_48 = arith.constant 0 : index
    %c540_49 = arith.constant 540 : index
    %64 = vector.load %arg3[%c0_48, %c540_49] : memref<2x576xf32, #tpu.memory_space<vmem>>, vector<2x36xf32>
    tpu.vector_store %arg3[%c0_48, %c540_49], %63 {strides = array<i32>} : memref<2x576xf32, #tpu.memory_space<vmem>>, vector<2x36xf32>,
    return
  }
  func.func @transform_0(%arg0: i32) -> (i32, i32) {
    %c0_i32 = arith.constant 0 : i32
    %c0_i32_0 = arith.constant 0 : i32
    return %arg0, %c0_i32 : i32, i32
  }
  func.func @transform_1(%arg0: i32) -> (i32, i32) {
    %c0_i32 = arith.constant 0 : i32
    %c0_i32_0 = arith.constant 0 : i32
    %c0_i32_1 = arith.constant 0 : i32
    return %c0_i32, %c0_i32_0 : i32, i32
  }
  func.func @transform_2(%arg0: i32) -> (i32, i32) {
    %c0_i32 = arith.constant 0 : i32
    %c0_i32_0 = arith.constant 0 : i32
    return %arg0, %c0_i32 : i32, i32
  }
}

</mosaic_0001>

<llo_original>
// kernel: tpu_custom_call.1
$region0: #{tpu_custom_call.1}
  #allocation0 [shape = 'u32[]', space=smem, size = 0x4, offset = 0x4, fixed_abs, tag = 'smem constant byte address 0x4 - core index']
  #allocation1 [shape = 'u32[144,128]{1,0:T(1,128)}', space=vmem, size = 0x12000, scoped, tag = 'internal scratch']
  %s0 = inlined_call_operand.hbm [shape: f32[8,36], index: 0, kind: input, shape index: {}]
  %s1 = inlined_call_operand.hbm [shape: f32[8,576], index: 1, kind: output, shape index: {}]
  %s2 = sld [smem:[#allocation0]]
  $region18: #{tpu_custom_call.1} parent=0
    _
  %s4 = ssub.s32 1, %s2
  %s5 = scalar_select 0, %s4, %s2
  $region1: #{tpu_custom_call.1} parent=0
    #allocation2 [shape = 'u8[4096]{0}', space=vmem, size = 0x1000, scoped, tag = 'input window, operand 0, single buffered']
    #allocation3 [shape = 's32[1]{0}', space=sflag, size = 0x4, scoped, tag = 'scoped memory for tpu_custom_call.1']
    #allocation4 [shape = 's32[1]{0}', space=sflag, size = 0x4, scoped, tag = 'scoped memory for tpu_custom_call.1']
    #allocation5 [shape = 'u8[20480]{0}', space=vmem, size = 0x5000, scoped, tag = 'output window, operand 0, single buffered']
    %6 = vsyncpa [#allocation3], 0
    %7 = vsyncpa [#allocation4], 0
    // Predicated region
    $region2: #{tpu_custom_call.1} parent=1 // pred_check
      _
    $region3: #{tpu_custom_call.1} parent=1 // pred_check_branch
      %9 = sbr.rel (0) target = $region5
    $region4: #{tpu_custom_call.1} parent=1 // pred_region
      %s11 = ssub.s32 128, 128
      %12 = vsyncadd [#allocation3], %s11
      %s14 = sshll.u32 [#allocation2], 4
      %s15 = int_to_ptr.vmem [resolvable:$true] %s14
      %17 = dma.hbm_to_vmem [thread:$0]  %s0, 128, %s15, [#allocation3]
    $region5: #{tpu_custom_call.1} parent=1 // pred_fallthru
      _
    // Predicated region
    $region6: #{tpu_custom_call.1} parent=1 // pred_check
      _
    $region7: #{tpu_custom_call.1} parent=1 // pred_check_branch
      %19 = sbr.rel (0) target = $region9
    $region8: #{tpu_custom_call.1} parent=1 // pred_region
      %20 = dma.done [#allocation3], 128
    $region9: #{tpu_custom_call.1} parent=1 // pred_fallthru
      _
    %v21 = vld [vmem:[#allocation2] sm:$0xff]
    %23 = vrot.lane.b32.xlu0 %v21, 36
    %v24 = vpop.permute.xlu0 %23
    %26 = vrot.lane.b32.xlu0 %v21, 72
    %v27 = vpop.permute.xlu0 %26
    %29 = vrot.lane.b32.xlu0 %v21, 108
    %v30 = vpop.permute.xlu0 %29
    %32 = vrot.lane.b32.xlu0 %v21, 16
    %v33 = vpop.permute.xlu0 %32
    %35 = vrot.lane.b32.xlu0 %v21, 52
    %v36 = vpop.permute.xlu0 %35
    %38 = vrot.lane.b32.xlu0 %v21, 88
    %v39 = vpop.permute.xlu0 %38
    %41 = vrot.lane.b32.xlu0 %v21, 124
    %v42 = vpop.permute.xlu0 %41
    %44 = vrot.lane.b32.xlu0 %v21, 32
    %v45 = vpop.permute.xlu0 %44
    %47 = vrot.lane.b32.xlu0 %v21, 68
    %v48 = vpop.permute.xlu0 %47
    %50 = vrot.lane.b32.xlu0 %v21, 104
    %v51 = vpop.permute.xlu0 %50
    %53 = vrot.lane.b32.xlu0 %v21, 12
    %v54 = vpop.permute.xlu0 %53
    %56 = vrot.lane.b32.xlu0 %v21, 48
    %v57 = vpop.permute.xlu0 %56
    %59 = vrot.lane.b32.xlu0 %v21, 84
    %v60 = vpop.permute.xlu0 %59
    %62 = vrot.lane.b32.xlu0 %v21, 120
    %v63 = vpop.permute.xlu0 %62
    %65 = vrot.lane.b32.xlu0 %v21, 28
    %v66 = vpop.permute.xlu0 %65
    %vm68 = vcmask 293888
    %v69 = vsel %vm68, %v21, %v24
    %vm70 = vcmask 588800
    %v71 = vsel %vm70, %v69, %v27
    %vm72 = vcmask 883712
    %v73 = vsel %vm72, %v71, %v30
    %vm74 = vcmask 130048
    %v75 = vsel %vm74, %v30, %v33
    %vm76 = vcmask 424960
    %v77 = vsel %vm76, %v75, %v36
    %vm78 = vcmask 719872
    %v79 = vsel %vm78, %v77, %v39
    %vm80 = vcmask 1014784
    %v81 = vsel %vm80, %v79, %v42
    %vm82 = vcmask 261120
    %v83 = vsel %vm82, %v42, %v45
    %vm84 = vcmask 556032
    %v85 = vsel %vm84, %v83, %v48
    %vm86 = vcmask 850944
    %v87 = vsel %vm86, %v85, %v51
    %vm88 = vcmask 97280
    %v89 = vsel %vm88, %v51, %v54
    %vm90 = vcmask 392192
    %v91 = vsel %vm90, %v89, %v57
    %vm92 = vcmask 687104
    %v93 = vsel %vm92, %v91, %v60
    %vm94 = vcmask 982016
    %v95 = vsel %vm94, %v93, %v63
    %vm96 = vcmask 228352
    %v97 = vsel %vm96, %v63, %v66
    %98 = vst [vmem:[#allocation5] sm:$0xff] %v73
    %99 = vst [vmem:[#allocation5 + $0x8] sm:$0xff] %v81
    %100 = vst [vmem:[#allocation5 + $0x10] sm:$0xff] %v87
    %101 = vst [vmem:[#allocation5 + $0x18] sm:$0xff] %v95
    %vm102 = vcmask 523264
    %103 = vst.msk [vmem:[#allocation5 + $0x20] sm:$0xff] %vm102, %v97
    // Predicated region
    $region10: #{tpu_custom_call.1} parent=1 // pred_check
      _
    $region11: #{tpu_custom_call.1} parent=1 // pred_check_branch
      %105 = sbr.rel (0) target = $region13
    $region12: #{tpu_custom_call.1} parent=1 // pred_region
      %s107 = ssub.s32 640, 640
      %108 = vsyncadd [#allocation4], %s107
      %s110 = sshll.u32 [#allocation5], 4
      %s111 = int_to_ptr.vmem [resolvable:$true] %s110
      %113 = dma.vmem_to_hbm [thread:$0]  %s111, 640, %s1, [#allocation4]
    $region13: #{tpu_custom_call.1} parent=1 // pred_fallthru
      _
    // Predicated region
    $region14: #{tpu_custom_call.1} parent=1 // pred_check
      _
    $region15: #{tpu_custom_call.1} parent=1 // pred_check_branch
      %115 = sbr.rel (0) target = $region17
    $region16: #{tpu_custom_call.1} parent=1 // pred_region
      %116 = dma.done [#allocation4], 640
    $region17: #{tpu_custom_call.1} parent=1 // pred_fallthru
      _
    %117 = vsyncpa [#allocation3], 1
    %118 = vsyncpa [#allocation4], 1

// kernel: mul.17
$region0: #{mul.17}
  #allocation0 [shape = 's32[1]{0}', space=sflag, size = 0x4, scoped, tag = 'scoped memory for mul.17']
  %s0 = inlined_call_operand.vmem [shape: f32[16,36], index: 0, kind: input, shape index: {}]
  %s1 = inlined_call_operand.vmem [shape: f32[16,36], index: 1, kind: input, shape index: {}]
  %s2 = inlined_call_operand.vmem [shape: f32[16,36], index: 2, kind: output, shape index: {}]
  %v3 = vld [vmem:[%s0] sm:$0xff]
  %v4 = vld [vmem:[%s1] sm:$0xff]
  %5 = xla_tuple %v3, %v4
  %6 = xla_tuple %5
  %v7 = vmul.f32 %v3, %v4
  %8 = xla_tuple %v7
  %9 = vst [vmem:[%s2] sm:$0xff] %v7
  %s10 = scalar_lea.vmem %s0, 8
  %v11 = vld [vmem:[%s10] sm:$0xff]
  %s12 = scalar_lea.vmem %s1, 8
  %v13 = vld [vmem:[%s12] sm:$0xff]
  %14 = xla_tuple %v11, %v13
  %15 = xla_tuple %14
  %v16 = vmul.f32 %v11, %v13
  %17 = xla_tuple %v16
  %s18 = scalar_lea.vmem %s2, 8
  %19 = vst [vmem:[%s18] sm:$0xff] %v16

// kernel: betas_muscle_predictor.1
$region0: #{betas_muscle_predictor.1}
  #allocation0 [shape = 'u32[]', space=smem, size = 0x4, offset = 0x4, fixed_abs, tag = 'smem constant byte address 0x4 - core index']
  #allocation1 [shape = 'u32[144,128]{1,0:T(1,128)}', space=vmem, size = 0x12000, scoped, tag = 'internal scratch']
  %s0 = inlined_call_operand.vmem [shape: f32[2,36], index: 0, kind: input, shape index: {}]
  %s1 = inlined_call_operand.vmem [shape: f32[1,576], index: 1, kind: input, shape index: {}]
  %s2 = inlined_call_operand.vmem [shape: f32[2,576], index: 2, kind: output, shape index: {}]
  %s3 = sld [smem:[#allocation0]]
  $region18: #{betas_muscle_predictor.1} parent=0
    _
  %s5 = ssub.s32 1, %s3
  %s6 = scalar_select 0, %s5, %s3
  // Predicated region
  $region2: #{betas_muscle_predictor.1} parent=0 // pred_check
    _
  $region3: #{betas_muscle_predictor.1} parent=0 // pred_check_branch
    %8 = sbr.rel (0) target = $region5
  $region4: #{betas_muscle_predictor.1} parent=0 // pred_region
    _
  $region5: #{betas_muscle_predictor.1} parent=0 // pred_fallthru
    _
  // Predicated region
  $region6: #{betas_muscle_predictor.1} parent=0 // pred_check
    _
  $region7: #{betas_muscle_predictor.1} parent=0 // pred_check_branch
    %10 = sbr.rel (0) target = $region9
  $region8: #{betas_muscle_predictor.1} parent=0 // pred_region
    _
  $region9: #{betas_muscle_predictor.1} parent=0 // pred_fallthru
    _
  %v11 = vld [vmem:[%s0] sm:$0x3]
  %v12 = vld [vmem:[%s1] sm:$0x1]
  %v14 = vlaneseq
  %v15 = vshrl.u32 %v14, 7
  %v16 = vsub.s32 0, %v15
  %v17 = vrot.slane %v12, %v16
  %v19 = vmul.f32 %v11, %v17
  %vm20 = vcmask 287744
  %21 = vst.msk [vmem:[%s2] sm:$0x3] %vm20, %v19
  %v22 = vld [vmem:[%s1] sm:$0x1]
  %v24 = vlaneseq
  %v25 = vshrl.u32 %v24, 7
  %v26 = vsub.s32 0, %v25
  %v27 = vrot.slane %v22, %v26
  %28 = vrot.lane.b32.xlu0 %v27, 92
  %v29 = vpop.permute.xlu0 %28
  %v31 = vmul.f32 %v11, %v29
  %v34 = vunpack.c.l.s4 1983009808
  %v35 = vunpack.c.0.s8 %v34
  %v36 = vlaneseq
  %v37 = vshrl.u32 %v36, 7
  %v38 = vsub.s32 %v35, %v37
  %v39 = vrot.slane %v31, %v38
  %40 = vrot.lane.b32.xlu0 %v39, 36
  %v41 = vpop.permute.xlu0 %40
  %vm43 = vcmask 582944
  %44 = vst.msk [vmem:[%s2] sm:$0x3] %vm43, %v41
  %v45 = vld [vmem:[%s1] sm:$0x1]
  %v47 = vlaneseq
  %v48 = vshrl.u32 %v47, 7
  %v49 = vsub.s32 0, %v48
  %v50 = vrot.slane %v45, %v49
  %51 = vrot.lane.b32.xlu0 %v50, 56
  %v52 = vpop.permute.xlu0 %51
  %v54 = vmul.f32 %v11, %v52
  %v57 = vunpack.c.l.s4 1983009808
  %v58 = vunpack.c.0.s8 %v57
  %v59 = vlaneseq
  %v60 = vshrl.u32 %v59, 7
  %v61 = vsub.s32 %v58, %v60
  %v62 = vrot.slane %v54, %v61
  %63 = vrot.lane.b32.xlu0 %v62, 72
  %v64 = vpop.permute.xlu0 %63
  %vm66 = vcmask 878144
  %67 = vst.msk [vmem:[%s2] sm:$0x3] %vm66, %v64
  %v68 = vld [vmem:[%s1] sm:$0x3]
  %v70 = vlaneseq
  %v71 = vshrl.u32 %v70, 7
  %v72 = vsub.s32 0, %v71
  %v73 = vrot.slane %v68, %v72
  %v74 = vlaneseq
  %v75 = vshrl.u32 %v74, 7
  %v76 = vsub.s32 1, %v75
  %v77 = vrot.slane %v68, %v76
  %78 = vrot.lane.b32.xlu0 %v73, 20
  %v79 = vpop.permute.xlu0 %78
  %80 = vrot.lane.b32.xlu0 %v77, 20
  %v81 = vpop.permute.xlu0 %80
  %vm82 = vcmask 162816
  %v83 = vsel %vm82, %v79, %v81
  %v85 = vmul.f32 %v11, %v83
  %v88 = vunpack.c.l.s4 1983009808
  %v89 = vunpack.c.0.s8 %v88
  %v90 = vlaneseq
  %v91 = vshrl.u32 %v90, 7
  %v92 = vsub.s32 %v89, %v91
  %v93 = vrot.slane %v85, %v92
  %94 = vrot.lane.b32.xlu0 %v93, 108
  %v95 = vpop.permute.xlu0 %94
  %v96 = vrot.slane %v95, 6
  %vm97 = vcmask 883712
  %v98 = vsel %vm97, %v96, %v95
  %vm100 = vcmask 1042272
  %vm101 = vcmask 125954
  %vm102 = vmor %vm101, %vm100
  %103 = vst.msk [vmem:[%s2] sm:$0xf] %vm102, %v98
  %v104 = vld [vmem:[%s1 + $0x1] sm:$0x1]
  %v106 = vlaneseq
  %v107 = vshrl.u32 %v106, 7
  %v108 = vsub.s32 0, %v107
  %v109 = vrot.slane %v104, %v108
  %110 = vrot.lane.b32.xlu0 %v109, 112
  %v111 = vpop.permute.xlu0 %110
  %v113 = vmul.f32 %v11, %v111
  %v116 = vunpack.c.l.s4 1983009808
  %v117 = vunpack.c.0.s8 %v116
  %v118 = vlaneseq
  %v119 = vshrl.u32 %v118, 7
  %v120 = vsub.s32 %v117, %v119
  %v121 = vrot.slane %v113, %v120
  %122 = vrot.lane.b32.xlu0 %v121, 16
  %v123 = vpop.permute.xlu0 %122
  %vm125 = vcmask 418944
  %126 = vst.msk [vmem:[%s2 + $0x2] sm:$0x3] %vm125, %v123
  %v127 = vld [vmem:[%s1 + $0x1] sm:$0x1]
  %v129 = vlaneseq
  %v130 = vshrl.u32 %v129, 7
  %v131 = vsub.s32 0, %v130
  %v132 = vrot.slane %v127, %v131
  %133 = vrot.lane.b32.xlu0 %v132, 76
  %v134 = vpop.permute.xlu0 %133
  %v136 = vmul.f32 %v11, %v134
  %v139 = vunpack.c.l.s4 1983009808
  %v140 = vunpack.c.0.s8 %v139
  %v141 = vlaneseq
  %v142 = vshrl.u32 %v141, 7
  %v143 = vsub.s32 %v140, %v142
  %v144 = vrot.slane %v136, %v143
  %145 = vrot.lane.b32.xlu0 %v144, 52
  %v146 = vpop.permute.xlu0 %145
  %vm148 = vcmask 714144
  %149 = vst.msk [vmem:[%s2 + $0x2] sm:$0x3] %vm148, %v146
  %v150 = vld [vmem:[%s1 + $0x1] sm:$0x1]
  %v152 = vlaneseq
  %v153 = vshrl.u32 %v152, 7
  %v154 = vsub.s32 0, %v153
  %v155 = vrot.slane %v150, %v154
  %156 = vrot.lane.b32.xlu0 %v155, 40
  %v157 = vpop.permute.xlu0 %156
  %v159 = vmul.f32 %v11, %v157
  %v162 = vunpack.c.l.s4 1983009808
  %v163 = vunpack.c.0.s8 %v162
  %v164 = vlaneseq
  %v165 = vshrl.u32 %v164, 7
  %v166 = vsub.s32 %v163, %v165
  %v167 = vrot.slane %v159, %v166
  %168 = vrot.lane.b32.xlu0 %v167, 88
  %v169 = vpop.permute.xlu0 %168
  %vm171 = vcmask 1009344
  %172 = vst.msk [vmem:[%s2 + $0x2] sm:$0x3] %vm171, %v169
  %v173 = vld [vmem:[%s1 + $0x1] sm:$0x3]
  %v175 = vlaneseq
  %v176 = vshrl.u32 %v175, 7
  %v177 = vsub.s32 0, %v176
  %v178 = vrot.slane %v173, %v177
  %v179 = vlaneseq
  %v180 = vshrl.u32 %v179, 7
  %v181 = vsub.s32 1, %v180
  %v182 = vrot.slane %v173, %v181
  %183 = vrot.lane.b32.xlu0 %v178, 4
  %v184 = vpop.permute.xlu0 %183
  %185 = vrot.lane.b32.xlu0 %v182, 4
  %v186 = vpop.permute.xlu0 %185
  %vm187 = vcmask 31744
  %v188 = vsel %vm187, %v184, %v186
  %v190 = vmul.f32 %v11, %v188
  %v193 = vunpack.c.l.s4 1983009808
  %v194 = vunpack.c.0.s8 %v193
  %v195 = vlaneseq
  %v196 = vshrl.u32 %v195, 7
  %v197 = vsub.s32 %v194, %v196
  %v198 = vrot.slane %v190, %v197
  %199 = vrot.lane.b32.xlu0 %v198, 124
  %v200 = vpop.permute.xlu0 %199
  %v201 = vrot.slane %v200, 6
  %vm202 = vcmask 1014784
  %v203 = vsel %vm202, %v201, %v200
  %vm205 = vcmask 1042400
  %vm206 = vcmask 257026
  %vm207 = vmor %vm206, %vm205
  %208 = vst.msk [vmem:[%s2 + $0x2] sm:$0xf] %vm207, %v203
  %v209 = vld [vmem:[%s1 + $0x2] sm:$0x1]
  %v211 = vlaneseq
  %v212 = vshrl.u32 %v211, 7
  %v213 = vsub.s32 0, %v212
  %v214 = vrot.slane %v209, %v213
  %215 = vrot.lane.b32.xlu0 %v214, 96
  %v216 = vpop.permute.xlu0 %215
  %v218 = vmul.f32 %v11, %v216
  %v221 = vunpack.c.l.s4 1983009808
  %v222 = vunpack.c.0.s8 %v221
  %v223 = vlaneseq
  %v224 = vshrl.u32 %v223, 7
  %v225 = vsub.s32 %v222, %v224
  %v226 = vrot.slane %v218, %v225
  %227 = vrot.lane.b32.xlu0 %v226, 32
  %v228 = vpop.permute.xlu0 %227
  %vm230 = vcmask 550144
  %231 = vst.msk [vmem:[%s2 + $0x4] sm:$0x3] %vm230, %v228
  %v232 = vld [vmem:[%s1 + $0x2] sm:$0x1]
  %v234 = vlaneseq
  %v235 = vshrl.u32 %v234, 7
  %v236 = vsub.s32 0, %v235
  %v237 = vrot.slane %v232, %v236
  %238 = vrot.lane.b32.xlu0 %v237, 60
  %v239 = vpop.permute.xlu0 %238
  %v241 = vmul.f32 %v11, %v239
  %v244 = vunpack.c.l.s4 1983009808
  %v245 = vunpack.c.0.s8 %v244
  %v246 = vlaneseq
  %v247 = vshrl.u32 %v246, 7
  %v248 = vsub.s32 %v245, %v247
  %v249 = vrot.slane %v241, %v248
  %250 = vrot.lane.b32.xlu0 %v249, 68
  %v251 = vpop.permute.xlu0 %250
  %vm253 = vcmask 845344
  %254 = vst.msk [vmem:[%s2 + $0x4] sm:$0x3] %vm253, %v251
  %v255 = vld [vmem:[%s1 + $0x2] sm:$0x3]
  %v257 = vlaneseq
  %v258 = vshrl.u32 %v257, 7
  %v259 = vsub.s32 0, %v258
  %v260 = vrot.slane %v255, %v259
  %v261 = vlaneseq
  %v262 = vshrl.u32 %v261, 7
  %v263 = vsub.s32 1, %v262
  %v264 = vrot.slane %v255, %v263
  %265 = vrot.lane.b32.xlu0 %v260, 24
  %v266 = vpop.permute.xlu0 %265
  %267 = vrot.lane.b32.xlu0 %v264, 24
  %v268 = vpop.permute.xlu0 %267
  %vm269 = vcmask 195584
  %v270 = vsel %vm269, %v266, %v268
  %v272 = vmul.f32 %v11, %v270
  %v275 = vunpack.c.l.s4 1983009808
  %v276 = vunpack.c.0.s8 %v275
  %v277 = vlaneseq
  %v278 = vshrl.u32 %v277, 7
  %v279 = vsub.s32 %v276, %v278
  %v280 = vrot.slane %v272, %v279
  %281 = vrot.lane.b32.xlu0 %v280, 104
  %v282 = vpop.permute.xlu0 %281
  %v283 = vrot.slane %v282, 6
  %vm284 = vcmask 850944
  %v285 = vsel %vm284, %v283, %v282
  %vm287 = vcmask 1042240
  %vm288 = vcmask 93186
  %vm289 = vmor %vm288, %vm287
  %290 = vst.msk [vmem:[%s2 + $0x4] sm:$0xf] %vm289, %v285
  %v291 = vld [vmem:[%s1 + $0x3] sm:$0x1]
  %v293 = vlaneseq
  %v294 = vshrl.u32 %v293, 7
  %v295 = vsub.s32 0, %v294
  %v296 = vrot.slane %v291, %v295
  %297 = vrot.lane.b32.xlu0 %v296, 116
  %v298 = vpop.permute.xlu0 %297
  %v300 = vmul.f32 %v11, %v298
  %v303 = vunpack.c.l.s4 1983009808
  %v304 = vunpack.c.0.s8 %v303
  %v305 = vlaneseq
  %v306 = vshrl.u32 %v305, 7
  %v307 = vsub.s32 %v304, %v306
  %v308 = vrot.slane %v300, %v307
  %309 = vrot.lane.b32.xlu0 %v308, 12
  %v310 = vpop.permute.xlu0 %309
  %vm312 = vcmask 386144
  %313 = vst.msk [vmem:[%s2 + $0x6] sm:$0x3] %vm312, %v310
  %v314 = vld [vmem:[%s1 + $0x3] sm:$0x1]
  %v316 = vlaneseq
  %v317 = vshrl.u32 %v316, 7
  %v318 = vsub.s32 0, %v317
  %v319 = vrot.slane %v314, %v318
  %320 = vrot.lane.b32.xlu0 %v319, 80
  %v321 = vpop.permute.xlu0 %320
  %v323 = vmul.f32 %v11, %v321
  %v326 = vunpack.c.l.s4 1983009808
  %v327 = vunpack.c.0.s8 %v326
  %v328 = vlaneseq
  %v329 = vshrl.u32 %v328, 7
  %v330 = vsub.s32 %v327, %v329
  %v331 = vrot.slane %v323, %v330
  %332 = vrot.lane.b32.xlu0 %v331, 48
  %v333 = vpop.permute.xlu0 %332
  %vm335 = vcmask 681344
  %336 = vst.msk [vmem:[%s2 + $0x6] sm:$0x3] %vm335, %v333
  %v337 = vld [vmem:[%s1 + $0x3] sm:$0x1]
  %v339 = vlaneseq
  %v340 = vshrl.u32 %v339, 7
  %v341 = vsub.s32 0, %v340
  %v342 = vrot.slane %v337, %v341
  %343 = vrot.lane.b32.xlu0 %v342, 44
  %v344 = vpop.permute.xlu0 %343
  %v346 = vmul.f32 %v11, %v344
  %v349 = vunpack.c.l.s4 1983009808
  %v350 = vunpack.c.0.s8 %v349
  %v351 = vlaneseq
  %v352 = vshrl.u32 %v351, 7
  %v353 = vsub.s32 %v350, %v352
  %v354 = vrot.slane %v346, %v353
  %355 = vrot.lane.b32.xlu0 %v354, 84
  %v356 = vpop.permute.xlu0 %355
  %vm358 = vcmask 976544
  %359 = vst.msk [vmem:[%s2 + $0x6] sm:$0x3] %vm358, %v356
  %v360 = vld [vmem:[%s1 + $0x3] sm:$0x3]
  %v362 = vlaneseq
  %v363 = vshrl.u32 %v362, 7
  %v364 = vsub.s32 0, %v363
  %v365 = vrot.slane %v360, %v364
  %v366 = vlaneseq
  %v367 = vshrl.u32 %v366, 7
  %v368 = vsub.s32 1, %v367
  %v369 = vrot.slane %v360, %v368
  %370 = vrot.lane.b32.xlu0 %v365, 8
  %v371 = vpop.permute.xlu0 %370
  %372 = vrot.lane.b32.xlu0 %v369, 8
  %v373 = vpop.permute.xlu0 %372
  %vm374 = vcmask 64512
  %v375 = vsel %vm374, %v371, %v373
  %v377 = vmul.f32 %v11, %v375
  %v380 = vunpack.c.l.s4 1983009808
  %v381 = vunpack.c.0.s8 %v380
  %v382 = vlaneseq
  %v383 = vshrl.u32 %v382, 7
  %v384 = vsub.s32 %v381, %v383
  %v385 = vrot.slane %v377, %v384
  %386 = vrot.lane.b32.xlu0 %v385, 120
  %v387 = vpop.permute.xlu0 %386
  %v388 = vrot.slane %v387, 6
  %vm389 = vcmask 982016
  %v390 = vsel %vm389, %v388, %v387
  %vm392 = vcmask 1042368
  %vm393 = vcmask 224258
  %vm394 = vmor %vm393, %vm392
  %395 = vst.msk [vmem:[%s2 + $0x6] sm:$0xf] %vm394, %v390
  %v396 = vld [vmem:[%s1 + $0x4] sm:$0x1]
  %v398 = vlaneseq
  %v399 = vshrl.u32 %v398, 7
  %v400 = vsub.s32 0, %v399
  %v401 = vrot.slane %v396, %v400
  %402 = vrot.lane.b32.xlu0 %v401, 100
  %v403 = vpop.permute.xlu0 %402
  %v405 = vmul.f32 %v11, %v403
  %v408 = vunpack.c.l.s4 1983009808
  %v409 = vunpack.c.0.s8 %v408
  %v410 = vlaneseq
  %v411 = vshrl.u32 %v410, 7
  %v412 = vsub.s32 %v409, %v411
  %v413 = vrot.slane %v405, %v412
  %414 = vrot.lane.b32.xlu0 %v413, 28
  %v415 = vpop.permute.xlu0 %414
  %vm417 = vcmask 517344
  %418 = vst.msk [vmem:[%s2 + $0x8] sm:$0x3] %vm417, %v415
  // Predicated region
  $region10: #{betas_muscle_predictor.1} parent=0 // pred_check
    _
  $region11: #{betas_muscle_predictor.1} parent=0 // pred_check_branch
    %420 = sbr.rel (0) target = $region13
  $region12: #{betas_muscle_predictor.1} parent=0 // pred_region
    _
  $region13: #{betas_muscle_predictor.1} parent=0 // pred_fallthru
    _
  // Predicated region
  $region14: #{betas_muscle_predictor.1} parent=0 // pred_check
    _
  $region15: #{betas_muscle_predictor.1} parent=0 // pred_check_branch
    %422 = sbr.rel (0) target = $region17
  $region16: #{betas_muscle_predictor.1} parent=0 // pred_region
    _
  $region17: #{betas_muscle_predictor.1} parent=0 // pred_fallthru
    _

</llo_original>
